<compile_context>
chip_gen: v7x
topology: tpu7x:2x2x1
jax: 0.10.0
libtpu: 0.0.40
codegen_flags: <defaults>
</compile_context>

<pallas_src>
import jax
import jax.numpy as jnp
from jax import lax
from jax.experimental import pallas as pl
from jax.experimental.pallas import tpu as pltpu


# ----------------------------------------------------------------------------
# Per-generation configuration
# ----------------------------------------------------------------------------

def _tpu_vmem_bytes():
    try:
        return int(pltpu.get_tpu_info().vmem_capacity_bytes)
    except Exception:
        return 64 * 1024 * 1024          # conservative (v7x-sized) fallback


_PHYS_VMEM = _tpu_vmem_bytes()
# v5e/v6e (128 MiB physical) -> 96 MiB scoped limit; v7x (64 MiB) -> 48 MiB.
_VMEM_LIMIT = max(32 * 2**20, min(_PHYS_VMEM - 16 * 2**20, 96 * 2**20))
_BIG_VMEM = _PHYS_VMEM >= 96 * 2**20
_TM_TARGET = 8192 if _BIG_VMEM else 4096     # flat-M rows per 1x1-conv tile
_ROWS_TARGET = 4096 if _BIG_VMEM else 2048   # TH*W elements per spatial row tile


def _round_up(x, m):
    return ((x + m - 1) // m) * m


def _pick_div(total, target, multiple=1):
    """Largest divisor of `total` <= target that is a multiple of `multiple`.
    With multiple == 1 this always succeeds (d == 1 at worst)."""
    target = max(multiple, min(total, target))
    for d in range(target, multiple - 1, -1):
        if total % d == 0 and d % multiple == 0:
            return d
    return total


def _pick_rows(H, W, target_elems, multiple=1):
    """Row-tile height TH: divides H, TH % multiple == 0, TH*W % 8 == 0
    (sublane alignment for flat (TH*W, C) blocks) and TH*W <= target."""
    cap = max(1, target_elems // max(W, 1))
    legal = [d for d in range(1, H + 1)
             if H % d == 0 and d % multiple == 0 and (d * W) % 8 == 0]
    assert legal, f"no aligned row tile for H={H}, W={W}, multiple={multiple}"
    under = [d for d in legal if d <= cap]
    return max(under) if under else min(legal)


# ----------------------------------------------------------------------------
# Pallas kernels
# ----------------------------------------------------------------------------

def _conv1x1_kernel(x_ref, w_ref, b_ref, o_ref):
    # x: (TM, Cin) bf16   w: (Cin, Cout) bf16   b: (1, Cout) f32
    # o: (TM, Cout) bf16
    y = jnp.dot(x_ref[...], w_ref[...], preferred_element_type=jnp.float32)
    o_ref[...] = (y + b_ref[...]).astype(o_ref.dtype)


def _lateral_fused_kernel(x_ref, w_ref, b_ref, t_ref, o_ref):
    # Fused lateral 1x1 conv + 2x nearest upsample of the coarser FPN level
    # + add.  The coarse block is never materialized at fine resolution; the
    # replication is folded into the add via broadcasting.
    #   x: (TH*W, Cin) bf16 (flat row tile)     w: (Cin, Cout) bf16
    #   b: (1, Cout) f32                        t: (1, TH//2, W//2, Cout) bf16
    #   o: (TH*W, Cout) bf16
    _, Hc, Wc, Cout = t_ref.shape
    y = jnp.dot(x_ref[...], w_ref[...], preferred_element_type=jnp.float32)
    y = (y + b_ref[...]).reshape(Hc, 2, Wc, 2, Cout)
    y = y + t_ref[0].astype(jnp.float32)[:, None, :, None, :]
    o_ref[...] = y.reshape(Hc * 2 * Wc * 2, Cout).astype(o_ref.dtype)


def _conv3x3_kernel(xp_ref, w_ref, b_ref, o_ref):
    # 3x3 conv, stride 1, pad 1: nine K=Cin MXU dots, slicing the padded
    # plane in VMEM (no 3x channel blow-up in HBM).
    #   xp: (1, H+2, W+2, Cin) bf16  -- whole padded plane, resident per image
    #   w : (9, Cin, Cout) bf16      -- tap index = 3*ky + kx
    #   b : (1, Cout) f32
    #   o : (1, TH, W, Cout) f32     -- row tile of the output
    _, TH, W, Cout = o_ref.shape
    Cin = xp_ref.shape[-1]
    r0 = pl.multiple_of(pl.program_id(1) * TH, TH)

    acc = jnp.zeros((TH * W, Cout), jnp.float32)
    for dy in range(3):
        rows = xp_ref[0, pl.ds(r0 + dy, TH)]            # (TH, W+2, Cin)
        for dx in range(3):
            x_slab = rows[:, dx:dx + W, :].reshape(TH * W, Cin)
            acc = acc + jnp.dot(x_slab, w_ref[3 * dy + dx],
                                preferred_element_type=jnp.float32)
    acc = acc + b_ref[...]
    o_ref[...] = acc.reshape(1, TH, W, Cout).astype(o_ref.dtype)


# ----------------------------------------------------------------------------
# pallas_call wrappers
# ----------------------------------------------------------------------------

def conv1x1(x_nhwc, w_t_bf16, b2_f32, *, tm_target=None):
    """1x1 conv as a row-tiled Pallas matmul (bf16 MXU, f32 acc, bf16 out)."""
    N, H, W, Cin = x_nhwc.shape
    Cout = w_t_bf16.shape[1]
    M = N * H * W
    tm_target = tm_target or _TM_TARGET
    TM = min(_round_up(M, 8), _round_up(tm_target, 8))
    Mp = _round_up(M, TM)

    x_flat = x_nhwc.reshape(M, Cin).astype(jnp.bfloat16)
    if Mp != M:
        x_flat = jnp.pad(x_flat, ((0, Mp - M), (0, 0)))

    cost = pl.CostEstimate(
        flops=2 * M * Cin * Cout, transcendentals=0,
        bytes_accessed=Mp * Cin * 2 + Cin * Cout * 2 + Mp * Cout * 2 + Cout * 4)

    y = pl.pallas_call(
        _conv1x1_kernel,
        out_shape=jax.ShapeDtypeStruct((Mp, Cout), jnp.bfloat16),
        grid=(Mp // TM,),
        in_specs=[
            pl.BlockSpec((TM, Cin), lambda i: (i, 0)),
            pl.BlockSpec((Cin, Cout), lambda i: (0, 0)),   # VMEM-resident
            pl.BlockSpec((1, Cout), lambda i: (0, 0)),
        ],
        out_specs=pl.BlockSpec((TM, Cout), lambda i: (i, 0)),
        compiler_params=pltpu.CompilerParams(
            dimension_semantics=("parallel",),
            vmem_limit_bytes=_VMEM_LIMIT),
        cost_estimate=cost,
    )(x_flat, w_t_bf16, b2_f32)
    return y[:M].reshape(N, H, W, Cout)


def conv1x1_upsample_add(x_nhwc, w_t_bf16, b2_f32, top_nhwc, *, rows_target=None):
    """Lateral 1x1 conv fused with 2x nearest upsample of `top` + add (bf16)."""
    N, H, W, Cin = x_nhwc.shape
    Cout = w_t_bf16.shape[1]
    Nt, Ht, Wt, Ct = top_nhwc.shape
    assert (Nt, 2 * Ht, 2 * Wt, Ct) == (N, H, W, Cout)
    assert H % 2 == 0 and W % 2 == 0

    rows_target = rows_target or _ROWS_TARGET
    TH = _pick_rows(H, W, rows_target, multiple=2)
    blocks_per_img = H // TH
    M = N * H * W

    x_flat = x_nhwc.reshape(M, Cin).astype(jnp.bfloat16)
    top = top_nhwc.astype(jnp.bfloat16)

    cost = pl.CostEstimate(
        flops=2 * M * Cin * Cout + M * Cout, transcendentals=0,
        bytes_accessed=(M * Cin * 2 + Cin * Cout * 2 + Cout * 4
                        + N * Ht * Wt * Cout * 2 + M * Cout * 2))

    y = pl.pallas_call(
        _lateral_fused_kernel,
        out_shape=jax.ShapeDtypeStruct((M, Cout), jnp.bfloat16),
        grid=(N, blocks_per_img),
        in_specs=[
            pl.BlockSpec((TH * W, Cin), lambda n, i: (n * blocks_per_img + i, 0)),
            pl.BlockSpec((Cin, Cout), lambda n, i: (0, 0)),
            pl.BlockSpec((1, Cout), lambda n, i: (0, 0)),
            pl.BlockSpec((1, TH // 2, Wt, Cout), lambda n, i: (n, i, 0, 0)),
        ],
        out_specs=pl.BlockSpec((TH * W, Cout),
                               lambda n, i: (n * blocks_per_img + i, 0)),
        compiler_params=pltpu.CompilerParams(
            dimension_semantics=("parallel", "parallel"),
            vmem_limit_bytes=_VMEM_LIMIT),
        cost_estimate=cost,
    )(x_flat, w_t_bf16, b2_f32, top)
    return y.reshape(N, H, W, Cout)


def conv3x3(x_nhwc, w9_bf16, b2_f32, *, rows_target=None):
    """3x3 conv, stride 1, pad 1.  The padded (Cin-only) bf16 plane stays
    VMEM-resident per image; output is row-tiled and pipelined; taps are nine
    K=Cin MXU dots formed in-kernel (no HBM channel fold)."""
    N, H, W, Cin = x_nhwc.shape
    Cout = w9_bf16.shape[-1]
    rows_target = rows_target or _ROWS_TARGET
    TH = _pick_div(H, max(1, rows_target // max(W, 1)), multiple=1)

    xp = jnp.pad(x_nhwc.astype(jnp.bfloat16), ((0, 0), (1, 1), (1, 1), (0, 0)))

    cost = pl.CostEstimate(
        flops=2 * N * H * W * 9 * Cin * Cout, transcendentals=0,
        bytes_accessed=(N * (H + 2) * (W + 2) * Cin * 2 + 9 * Cin * Cout * 2
                        + N * H * W * Cout * 4 + Cout * 4))

    return pl.pallas_call(
        _conv3x3_kernel,
        out_shape=jax.ShapeDtypeStruct((N, H, W, Cout), jnp.float32),
        grid=(N, H // TH),
        in_specs=[
            # whole padded plane; block index constant over the row axis, so
            # it is fetched once per image and stays resident.
            pl.BlockSpec((1, H + 2, W + 2, Cin), lambda n, i: (n, 0, 0, 0)),
            pl.BlockSpec((9, Cin, Cout), lambda n, i: (0, 0, 0)),
            pl.BlockSpec((1, Cout), lambda n, i: (0, 0)),
        ],
        out_specs=pl.BlockSpec((1, TH, W, Cout), lambda n, i: (n, i, 0, 0)),
        compiler_params=pltpu.CompilerParams(
            dimension_semantics=("parallel", "parallel"),
            vmem_limit_bytes=_VMEM_LIMIT),
        cost_estimate=cost,
    )(xp, w9_bf16, b2_f32)


# ----------------------------------------------------------------------------
# Module
# ----------------------------------------------------------------------------

class DetectorBackboneWithFPNPallas:
    """JAX/Pallas re-implementation of DetectorBackboneWithFPN.forward."""

    def __init__(self, out_channels, c_channels=(32, 64, 128), seed=0):
        self.out_channels = out_channels
        self.c3_ch, self.c4_ch, self.c5_ch = c_channels
        key = jax.random.PRNGKey(seed)
        ks = jax.random.split(key, 16)

        def conv_init(kw, kb, cout, cin, kh, kwid):
            fan_in = cin * kh * kwid
            bound = 1.0 / jnp.sqrt(fan_in)
            w = jax.random.uniform(kw, (cout, cin, kh, kwid),
                                   jnp.float32, -bound, bound)
            b = jax.random.uniform(kb, (cout,), jnp.float32, -bound, bound)
            return w, b

        oc = out_channels
        # lateral 1x1 convs (f32 OIHW kept for the reference path)
        self.w_m3, self.b_m3 = conv_init(ks[0], ks[1], oc, self.c3_ch, 1, 1)
        self.w_m4, self.b_m4 = conv_init(ks[2], ks[3], oc, self.c4_ch, 1, 1)
        self.w_m5, self.b_m5 = conv_init(ks[4], ks[5], oc, self.c5_ch, 1, 1)
        # output 3x3 convs
        self.w_p3, self.b_p3 = conv_init(ks[6], ks[7], oc, oc, 3, 3)
        self.w_p4, self.b_p4 = conv_init(ks[8], ks[9], oc, oc, 3, 3)
        self.w_p5, self.b_p5 = conv_init(ks[10], ks[11], oc, oc, 3, 3)
        # stub-backbone 1x1 projection weights (3 -> Ck), deterministic
        self.bb_w3 = jax.random.normal(ks[12], (3, self.c3_ch), jnp.float32) * 0.2
        self.bb_w4 = jax.random.normal(ks[13], (3, self.c4_ch), jnp.float32) * 0.2
        self.bb_w5 = jax.random.normal(ks[14], (3, self.c5_ch), jnp.float32) * 0.2

        # ---- precomputed kernel-layout weights (done once, not per forward) ----
        def t1x1(w):          # (Cout, Cin, 1, 1) -> (Cin, Cout) bf16
            cout, cin = w.shape[:2]
            return jnp.transpose(w.reshape(cout, cin), (1, 0)).astype(jnp.bfloat16)

        def t3x3(w):          # (Cout, Cin, 3, 3) -> (9, Cin, Cout) bf16, tap=3*ky+kx
            cout, cin = w.shape[:2]
            return (jnp.transpose(w, (2, 3, 1, 0))       # (ky, kx, Cin, Cout)
                    .reshape(9, cin, cout).astype(jnp.bfloat16))

        self.wm3_t, self.wm4_t, self.wm5_t = t1x1(self.w_m3), t1x1(self.w_m4), t1x1(self.w_m5)
        self.wp3_9, self.wp4_9, self.wp5_9 = t3x3(self.w_p3), t3x3(self.w_p4), t3x3(self.w_p5)
        self.bm3_2 = self.b_m3.reshape(1, oc)
        self.bm4_2 = self.b_m4.reshape(1, oc)
        self.bm5_2 = self.b_m5.reshape(1, oc)
        self.bp3_2 = self.b_p3.reshape(1, oc)
        self.bp4_2 = self.b_p4.reshape(1, oc)
        self.bp5_2 = self.b_p5.reshape(1, oc)

    @property
    def fpn_strides(self):
        return {"p3": 8, "p4": 16, "p5": 32}

    def _stub_backbone(self, images_nchw):
        # TODO(synk): stand-in for pretrained RegNet-X 400MF feature extractor.
        x = jnp.transpose(images_nchw, (0, 2, 3, 1))  # NHWC
        N, H, W, C = x.shape
        feats = {}
        for name, s, proj in (("c3", 8, self.bb_w3),
                              ("c4", 16, self.bb_w4),
                              ("c5", 32, self.bb_w5)):
            pooled = x.reshape(N, H // s, s, W // s, s, C).mean(axis=(2, 4))
            feats[name] = jnp.einsum("nhwc,cd->nhwd", pooled, proj)
        return feats

    def forward(self, images_nchw):
        feats = self._stub_backbone(images_nchw)
        c3, c4, c5 = feats["c3"], feats["c4"], feats["c5"]

        # lateral 1x1 convs (bf16 intermediates); top-down 2x upsample fused
        # into the add kernels (no HBM round trip for the upsampled feature)
        m5 = conv1x1(c5, self.wm5_t, self.bm5_2)
        m4 = conv1x1_upsample_add(c4, self.wm4_t, self.bm4_2, m5)
        m3 = conv1x1_upsample_add(c3, self.wm3_t, self.bm3_2, m4)

        # output 3x3 convs (f32 outputs)
        p5 = conv3x3(m5, self.wp5_9, self.bp5_2)
        p4 = conv3x3(m4, self.wp4_9, self.bp4_2)
        p3 = conv3x3(m3, self.wp3_9, self.bp3_2)

        to_nchw = lambda t: jnp.transpose(t, (0, 3, 1, 2))
        return {"p3": to_nchw(p3), "p4": to_nchw(p4), "p5": to_nchw(p5)}


# ----------------------------------------------------------------------------
# Plain-JAX reference (numerical sanity check of the Pallas path)
# ----------------------------------------------------------------------------

def _ref_conv_nchw(x, w, b, padding):
    y = lax.conv_general_dilated(
        x, w, window_strides=(1, 1), padding=[(padding, padding)] * 2,
        dimension_numbers=("NCHW", "OIHW", "NCHW"))
    return y + b.reshape(1, -1, 1, 1)


def _ref_forward(model, images_nchw):
    feats = model._stub_backbone(images_nchw)
    nchw = lambda t: jnp.transpose(t, (0, 3, 1, 2))
    c3, c4, c5 = nchw(feats["c3"]), nchw(feats["c4"]), nchw(feats["c5"])
    m5 = _ref_conv_nchw(c5, model.w_m5, model.b_m5, 0)
    m4 = _ref_conv_nchw(c4, model.w_m4, model.b_m4, 0)
    m3 = _ref_conv_nchw(c3, model.w_m3, model.b_m3, 0)
    m5_up = jnp.repeat(jnp.repeat(m5, 2, axis=2), 2, axis=3)
    m4 = m4 + m5_up
    m4_up = jnp.repeat(jnp.repeat(m4, 2, axis=2), 2, axis=3)
    m3 = m3 + m4_up
    return {
        "p5": _ref_conv_nchw(m5, model.w_p5, model.b_p5, 1),
        "p4": _ref_conv_nchw(m4, model.w_p4, model.b_p4, 1),
        "p3": _ref_conv_nchw(m3, model.w_p3, model.b_p3, 1),
    }


# ----------------------------------------------------------------------------
# Main
# ----------------------------------------------------------------------------

if __name__ == "__main__":
    key = jax.random.PRNGKey(0)
    images = jax.random.normal(key, (2, 3, 64, 64), jnp.float32)  # NCHW

    # out_channels=128 keeps every Pallas output store lane-dense (>=128).
    model = DetectorBackboneWithFPNPallas(out_channels=128)
    out = model.forward(images)
    out = jax.tree_util.tree_map(jax.block_until_ready, out)

    ref = _ref_forward(model, images)

    # bf16 inputs + bf16 intermediates vs. f32 reference -> 2e-2 tolerance.
    ok = True
    for name in ("p3", "p4", "p5"):
        a, b = out[name], ref[name]
        if a.shape != b.shape or not bool(
            jnp.allclose(a, b, rtol=2e-2, atol=2e-2)
        ):
            ok = False
            print(f"MISMATCH in {name}: shape {a.shape} vs {b.shape}, "
                  f"max abs err {float(jnp.max(jnp.abs(a - b)))}")

    if ok:
        print("KERNEL_OK")
</pallas_src>

<mosaic_0001>
module attributes {stable_mosaic.version = 11 : i64} {
  func.func @_conv1x1_kernel(%arg0: i32, %arg1: memref<8x128xbf16, #tpu.memory_space<vmem>>, %arg2: memref<128x128xbf16, #tpu.memory_space<vmem>>, %arg3: memref<1x128xf32, #tpu.memory_space<vmem>>, %arg4: memref<8x128xbf16, #tpu.memory_space<vmem>>) attributes {dimension_semantics = [#tpu.dimension_semantics<parallel>], iteration_bounds = array<i64: 1>, scalar_prefetch = 0 : i64, scratch_operands = 0 : i64, tpu.core_type = #tpu.core_type<tc>, window_params = [{transform_indices = @transform_0, window_bounds = array<i64: 8, 128>}, {pipeline_mode = #tpu.pipeline_mode<synchronous>, transform_indices = @transform_1, window_bounds = array<i64: 128, 128>}, {pipeline_mode = #tpu.pipeline_mode<synchronous>, transform_indices = @transform_2, window_bounds = array<i64: 1, 128>}, {transform_indices = @transform_3, window_bounds = array<i64: 8, 128>}]} {
    %c0 = arith.constant 0 : index
    %c0_0 = arith.constant 0 : index
    %0 = vector.load %arg1[%c0, %c0_0] : memref<8x128xbf16, #tpu.memory_space<vmem>>, vector<8x128xbf16>
    %c0_1 = arith.constant 0 : index
    %c0_2 = arith.constant 0 : index
    %1 = vector.load %arg2[%c0_1, %c0_2] : memref<128x128xbf16, #tpu.memory_space<vmem>>, vector<128x128xbf16>
    %cst = arith.constant dense<0.000000e+00> : vector<8x128xf32>
    %2 = tpu.matmul %0, %1, %cst {dimension_numbers = #tpu.dot_dimension_numbers<[1], [0], [0], [1], [0, 0, 1, 1], [], []>} : vector<8x128xbf16>, vector<128x128xbf16>, vector<8x128xf32> -> vector<8x128xf32>
    %c0_3 = arith.constant 0 : index
    %c0_4 = arith.constant 0 : index
    %3 = vector.load %arg3[%c0_3, %c0_4] : memref<1x128xf32, #tpu.memory_space<vmem>>, vector<1x128xf32>
    %4 = vector.broadcast %3 : vector<1x128xf32> to vector<8x128xf32>
    %5 = arith.addf %2, %4 : vector<8x128xf32>
    %6 = arith.truncf %5 : vector<8x128xf32> to vector<8x128xbf16>
    %c0_5 = arith.constant 0 : index
    %c0_6 = arith.constant 0 : index
    %7 = vector.load %arg4[%c0_5, %c0_6] : memref<8x128xbf16, #tpu.memory_space<vmem>>, vector<8x128xbf16>
    tpu.vector_store %arg4[%c0_5, %c0_6], %6 {strides = array<i32>} : memref<8x128xbf16, #tpu.memory_space<vmem>>, vector<8x128xbf16>,
    return
  }
  func.func @transform_0(%arg0: i32) -> (i32, i32) {
    %c0_i32 = arith.constant 0 : i32
    %c0_i32_0 = arith.constant 0 : i32
    return %arg0, %c0_i32 : i32, i32
  }
  func.func @transform_1(%arg0: i32) -> (i32, i32) {
    %c0_i32 = arith.constant 0 : i32
    %c0_i32_0 = arith.constant 0 : i32
    %c0_i32_1 = arith.constant 0 : i32
    return %c0_i32, %c0_i32_0 : i32, i32
  }
  func.func @transform_2(%arg0: i32) -> (i32, i32) {
    %c0_i32 = arith.constant 0 : i32
    %c0_i32_0 = arith.constant 0 : i32
    %c0_i32_1 = arith.constant 0 : i32
    return %c0_i32, %c0_i32_0 : i32, i32
  }
  func.func @transform_3(%arg0: i32) -> (i32, i32) {
    %c0_i32 = arith.constant 0 : i32
    %c0_i32_0 = arith.constant 0 : i32
    return %arg0, %c0_i32 : i32, i32
  }
}

</mosaic_0001>

<llo_original>
// kernel: tpu_custom_call.1
$region0: #{tpu_custom_call.1}
  #allocation0 [shape = 'u32[]', space=smem, size = 0x4, offset = 0x4, fixed_abs, tag = 'smem constant byte address 0x4 - core index']
  #allocation1 [shape = 'u32[144,128]{1,0:T(1,128)}', space=vmem, size = 0x12000, scoped, tag = 'internal scratch']
  %s0 = inlined_call_operand.hbm [shape: bf16[8,128], index: 0, kind: input, shape index: {}]
  %s1 = inlined_call_operand.hbm [shape: bf16[128,128], index: 1, kind: input, shape index: {}]
  %s2 = inlined_call_operand.vmem [shape: f32[1,128], index: 2, kind: input, shape index: {}]
  %s3 = inlined_call_operand.hbm [shape: bf16[8,128], index: 3, kind: output, shape index: {}]
  %s4 = sld [smem:[#allocation0]]
  $region30: #{tpu_custom_call.1} parent=0
    _
  %s6 = ssub.s32 1, %s4
  %s7 = scalar_select 0, %s6, %s4
  $region1: #{tpu_custom_call.1} parent=0
    #allocation2 [shape = 'u8[2048]{0}', space=vmem, size = 0x800, scoped, tag = 'input window, operand 0, single buffered']
    #allocation3 [shape = 's32[1]{0}', space=sflag, size = 0x4, scoped, tag = 'scoped memory for tpu_custom_call.1']
    #allocation4 [shape = 's32[1]{0}', space=sflag, size = 0x4, scoped, tag = 'scoped memory for tpu_custom_call.1']
    #allocation5 [shape = 'u8[32768]{0}', space=vmem, size = 0x8000, scoped, tag = 'input window, operand 1, single buffered']
    #allocation6 [shape = 's32[1]{0}', space=sflag, size = 0x4, scoped, tag = 'scoped memory for tpu_custom_call.1']
    #allocation7 [shape = 'u8[2048]{0}', space=vmem, size = 0x800, scoped, tag = 'output window, operand 0, single buffered']
    %8 = vsyncpa [#allocation3], 0
    %9 = vsyncpa [#allocation6], 0
    %10 = vsyncpa [#allocation4], 0
    // Predicated region
    $region2: #{tpu_custom_call.1} parent=1 // pred_check
      _
    $region3: #{tpu_custom_call.1} parent=1 // pred_check_branch
      %12 = sbr.rel (0) target = $region5
    $region4: #{tpu_custom_call.1} parent=1 // pred_region
      %s14 = ssub.s32 64, 64
      %15 = vsyncadd [#allocation3], %s14
      %s17 = sshll.u32 [#allocation2], 4
      %s18 = int_to_ptr.vmem [resolvable:$true] %s17
      %20 = dma.hbm_to_vmem [thread:$0]  %s0, 64, %s18, [#allocation3]
    $region5: #{tpu_custom_call.1} parent=1 // pred_fallthru
      _
    // Predicated region
    $region6: #{tpu_custom_call.1} parent=1 // pred_check
      _
    $region7: #{tpu_custom_call.1} parent=1 // pred_check_branch
      %22 = sbr.rel (0) target = $region9
    $region8: #{tpu_custom_call.1} parent=1 // pred_region
      %s24 = ssub.s32 1024, 1024
      %25 = vsyncadd [#allocation6], %s24
      %s26 = sshll.u32 [#allocation5], 4
      %s27 = int_to_ptr.vmem [resolvable:$true] %s26
      %32 = dma.hbm_to_vmem [thread:$0]  %s1, 1024, %s27, [#allocation6], 64, 64, 4
    $region9: #{tpu_custom_call.1} parent=1 // pred_fallthru
      _
    // Predicated region
    $region10: #{tpu_custom_call.1} parent=1 // pred_check
      _
    $region11: #{tpu_custom_call.1} parent=1 // pred_check_branch
      %34 = sbr.rel (0) target = $region13
    $region12: #{tpu_custom_call.1} parent=1 // pred_region
      _
    $region13: #{tpu_custom_call.1} parent=1 // pred_fallthru
      _
    // Predicated region
    $region14: #{tpu_custom_call.1} parent=1 // pred_check
      _
    $region15: #{tpu_custom_call.1} parent=1 // pred_check_branch
      %36 = sbr.rel (0) target = $region17
    $region16: #{tpu_custom_call.1} parent=1 // pred_region
      %37 = dma.done [#allocation3], 64
    $region17: #{tpu_custom_call.1} parent=1 // pred_fallthru
      _
    // Predicated region
    $region18: #{tpu_custom_call.1} parent=1 // pred_check
      _
    $region19: #{tpu_custom_call.1} parent=1 // pred_check_branch
      %39 = sbr.rel (0) target = $region21
    $region20: #{tpu_custom_call.1} parent=1 // pred_region
      %40 = dma.done [#allocation6], 1024
    $region21: #{tpu_custom_call.1} parent=1 // pred_fallthru
      _
    %v42 = vld [vmem:[#allocation2] sm:$0xf]
    %v43 = vld [vmem:[#allocation5] sm:$0xf]
    %v44 = vld [vmem:[#allocation5 + $0x4] sm:$0xf]
    %v45 = vld [vmem:[#allocation5 + $0x8] sm:$0xf]
    %v46 = vld [vmem:[#allocation5 + $0xc] sm:$0xf]
    %v47 = vld [vmem:[#allocation5 + $0x10] sm:$0xf]
    %v48 = vld [vmem:[#allocation5 + $0x14] sm:$0xf]
    %v49 = vld [vmem:[#allocation5 + $0x18] sm:$0xf]
    %v50 = vld [vmem:[#allocation5 + $0x1c] sm:$0xf]
    %v51 = vld [vmem:[#allocation5 + $0x20] sm:$0xf]
    %v52 = vld [vmem:[#allocation5 + $0x24] sm:$0xf]
    %v53 = vld [vmem:[#allocation5 + $0x28] sm:$0xf]
    %v54 = vld [vmem:[#allocation5 + $0x2c] sm:$0xf]
    %v55 = vld [vmem:[#allocation5 + $0x30] sm:$0xf]
    %v56 = vld [vmem:[#allocation5 + $0x34] sm:$0xf]
    %v57 = vld [vmem:[#allocation5 + $0x38] sm:$0xf]
    %v58 = vld [vmem:[#allocation5 + $0x3c] sm:$0xf]
    %v59 = vld [vmem:[%s2] sm:$0x1]
    %v61 = vlaneseq
    %v62 = vshrl.u32 %v61, 7
    %v63 = vsub.s32 0, %v62
    %v64 = vrot.slane %v59, %v63
    %v82 = vunpack.c.l.b16 %v43
    %v83 = vunpack.c.l.b16 %v44
    %v84 = vunpack.c.l.b16 %v45
    %v85 = vunpack.c.l.b16 %v46
    %v86 = vunpack.c.l.b16 %v47
    %v87 = vunpack.c.l.b16 %v48
    %v88 = vunpack.c.l.b16 %v49
    %v89 = vunpack.c.l.b16 %v50
    %v90 = vunpack.c.l.b16 %v51
    %v91 = vunpack.c.l.b16 %v52
    %v92 = vunpack.c.l.b16 %v53
    %v93 = vunpack.c.l.b16 %v54
    %v94 = vunpack.c.l.b16 %v55
    %v95 = vunpack.c.l.b16 %v56
    %v96 = vunpack.c.l.b16 %v57
    %v97 = vunpack.c.l.b16 %v58
    %v98 = vpack.c.b16 %v83, %v82
    %v99 = vpack.c.b16 %v85, %v84
    %v100 = vpack.c.b16 %v87, %v86
    %v101 = vpack.c.b16 %v89, %v88
    %v102 = vpack.c.b16 %v91, %v90
    %v103 = vpack.c.b16 %v93, %v92
    %v104 = vpack.c.b16 %v95, %v94
    %v105 = vpack.c.b16 %v97, %v96
    %114 = vmatprep.subr.bf16.mxu0 0
    %115 = vmatpush1.bf16.msra.mxu0 %v98
    %116 = vmatprep.subr.bf16.mxu0 0
    %117 = vmatpush1.bf16.msra.mxu0 %v99
    %118 = vmatprep.subr.bf16.mxu0 0
    %119 = vmatpush1.bf16.msra.mxu0 %v100
    %120 = vmatprep.subr.bf16.mxu0 0
    %121 = vmatpush1.bf16.msra.mxu0 %v101
    %122 = vmatprep.subr.bf16.mxu0 0
    %123 = vmatpush1.bf16.msra.mxu0 %v102
    %124 = vmatprep.subr.bf16.mxu0 0
    %125 = vmatpush1.bf16.msra.mxu0 %v103
    %126 = vmatprep.subr.bf16.mxu0 0
    %127 = vmatpush1.bf16.msra.mxu0 %v104
    %128 = vmatprep.subr.bf16.mxu0 0
    %129 = vmatpush1.bf16.msra.mxu0 %v105
    %130 = vmatprep.subr.bf16.mxu0 0
    %131 = vmatpush1.bf16.msra.mxu0 0
    %132 = vmatprep.subr.bf16.mxu0 0
    %133 = vmatpush1.bf16.msra.mxu0 0
    %134 = vmatprep.subr.bf16.mxu0 0
    %135 = vmatpush1.bf16.msra.mxu0 0
    %136 = vmatprep.subr.bf16.mxu0 0
    %137 = vmatpush1.bf16.msra.mxu0 0
    %138 = vmatprep.subr.bf16.mxu0 0
    %139 = vmatpush1.bf16.msra.mxu0 0
    %140 = vmatprep.subr.bf16.mxu0 0
    %141 = vmatpush1.bf16.msra.mxu0 0
    %142 = vmatprep.subr.bf16.mxu0 0
    %143 = vmatpush1.bf16.msra.mxu0 0
    %144 = vmatprep.subr.bf16.mxu0 0
    %145 = vmatpush1.bf16.msra.mxu0 0
    %146 = vmatprep.mubr.bf16.mxu0 0
    %147 = vmatmul.mubr.bf16.gmra.mrb[0].mxu0 %v42
    %v148 = vpop.f32.mrb[0].mxu0
    %v149 = vadd.f32 %v64, %v148
    %v150 = vpop.f32.mrb[0].mxu0
    %v151 = vpop.f32.mrb[0].mxu0
    %v152 = vpop.f32.mrb[0].mxu0
    %153 = vdwg.mxu0
    %v154 = vpack.c.bf16 %v149, %v149
    %155 = vst [vmem:[#allocation7] sm:$0xf] %v154
    // Predicated region
    $region22: #{tpu_custom_call.1} parent=1 // pred_check
      _
    $region23: #{tpu_custom_call.1} parent=1 // pred_check_branch
      %157 = sbr.rel (0) target = $region25
    $region24: #{tpu_custom_call.1} parent=1 // pred_region
      %s159 = ssub.s32 64, 64
      %160 = vsyncadd [#allocation4], %s159
      %s162 = sshll.u32 [#allocation7], 4
      %s163 = int_to_ptr.vmem [resolvable:$true] %s162
      %165 = dma.vmem_to_hbm [thread:$0]  %s163, 64, %s3, [#allocation4]
    $region25: #{tpu_custom_call.1} parent=1 // pred_fallthru
      _
    // Predicated region
    $region26: #{tpu_custom_call.1} parent=1 // pred_check
      _
    $region27: #{tpu_custom_call.1} parent=1 // pred_check_branch
      %167 = sbr.rel (0) target = $region29
    $region28: #{tpu_custom_call.1} parent=1 // pred_region
      %168 = dma.done [#allocation4], 64
    $region29: #{tpu_custom_call.1} parent=1 // pred_fallthru
      _
    %169 = vsyncpa [#allocation3], 1
    %170 = vsyncpa [#allocation6], 1
    %171 = vsyncpa [#allocation4], 1

</llo_original>
